<compile_context>
chip_gen: v7x
topology: tpu7x:2x2x1
jax: 0.10.0
libtpu: 0.0.40
codegen_flags: <defaults>
</compile_context>

<pallas_src>
import jax
import jax.numpy as jnp
from jax.experimental import pallas as pl
from jax.experimental.pallas import tpu as pltpu


# ---------------------------------------------------------------------------
# Pallas kernel: separable bilinear resample of one (Cb, H, W) channel block.
# ---------------------------------------------------------------------------
def _resize_crop_kernel(x_ref, ah_ref, awt_ref, o_ref):
    # x_ref  : (Cb, H, W)  input channels of image n (native dtype)
    # ah_ref : (H, H)      row interpolation matrix  [out_h, in_h], fp32
    # awt_ref: (W, W)      column interpolation matrix, pre-transposed in the
    #                      wrapper to [in_w, out_w] so no in-kernel transpose
    # o_ref  : (Cb, H, W)  output block
    ah = ah_ref[...]
    awt = awt_ref[...]
    cb = x_ref.shape[0]
    for c in range(cb):  # static, small unrolled loop (cb <= channel_block)
        xc = x_ref[c].astype(jnp.float32)                           # (H, W)
        yc = jnp.dot(ah, xc, preferred_element_type=jnp.float32)    # rows
        oc = jnp.dot(yc, awt, preferred_element_type=jnp.float32)   # cols
        o_ref[c] = oc.astype(o_ref.dtype)


def _pick_channel_block(C, cap=8):
    cb = min(C, cap)
    while C % cb:
        cb -= 1
    return cb


def resize_crop_pallas(x, a_h, a_w_t, *, channel_block=8):
    """out[n, c] = a_h[n] @ x[n, c] @ a_w_t[n] for NCHW `x` (per-image warp)."""
    N, C, H, W = x.shape
    Cb = _pick_channel_block(C, channel_block)
    grid = (N, C // Cb)
    return pl.pallas_call(
        _resize_crop_kernel,
        out_shape=jax.ShapeDtypeStruct(x.shape, x.dtype),
        grid_spec=pltpu.PrefetchScalarGridSpec(
            num_scalar_prefetch=0,
            grid=grid,
            in_specs=[
                pl.BlockSpec((None, Cb, H, W), lambda n, cb: (n, cb, 0, 0)),
                pl.BlockSpec((None, H, H), lambda n, cb: (n, 0, 0)),
                pl.BlockSpec((None, W, W), lambda n, cb: (n, 0, 0)),
            ],
            out_specs=pl.BlockSpec((None, Cb, H, W),
                                   lambda n, cb: (n, cb, 0, 0)),
        ),
        compiler_params=pltpu.CompilerParams(
            dimension_semantics=("parallel", "parallel")),
    )(x, a_h, a_w_t)


# ---------------------------------------------------------------------------
# Wrapper: random parameters + per-axis bilinear interpolation matrices.
# ---------------------------------------------------------------------------
def _axis_interp_matrix(size, scale, trans):
    """Per-sample 1-D bilinear resampling matrix A (N, out, in) reproducing
    F.affine_grid + F.grid_sample(align_corners=False, padding_mode='zeros')
    along one axis for the diagonal affine [scale, trans]."""
    g = (2.0 * jnp.arange(size, dtype=jnp.float32) + 1.0) / size - 1.0  # out coords
    src = scale[:, None] * g[None, :] + trans[:, None]                  # (N, out)
    idx = ((src + 1.0) * size - 1.0) * 0.5                              # frac input index
    i0f = jnp.floor(idx)
    w1 = idx - i0f
    w0 = 1.0 - w1
    i0 = i0f.astype(jnp.int32)
    i1 = i0 + 1
    j = jnp.arange(size, dtype=jnp.int32)
    hit0 = (j[None, None, :] == i0[:, :, None]) & \
           (i0[:, :, None] >= 0) & (i0[:, :, None] < size)
    hit1 = (j[None, None, :] == i1[:, :, None]) & \
           (i1[:, :, None] >= 0) & (i1[:, :, None] < size)
    return (w0[:, :, None] * hit0.astype(jnp.float32)
            + w1[:, :, None] * hit1.astype(jnp.float32))                # (N, out, in)


def random_resize_crop(x, key, crop_size=None, resize_range=(0.5, 2.0), prob=0.5):
    """Forward pass of Random_ResizeCrop for NCHW `x`.

    Returns (out, (scales, trs), applied).  `crop_size` is accepted for parity
    with the module but (exactly as in the PyTorch forward) does not affect
    the output.
    """
    # TODO(synk): the PyTorch module's `self.reuse` / `self.last_applied`
    # cross-call caching is nn.Module state; this stateless wrapper re-draws
    # parameters per call (re-apply by reusing the same `key`).
    del crop_size
    N, C, H, W = x.shape
    k_apply, k_scale, k_tr = jax.random.split(key, 3)

    # torch.rand(1) < self.prob  (host-side decision, like the eager module).
    apply = bool(jax.random.uniform(k_apply, ()) < prob)

    # random_sym_matrix(sh, scale=resize_range[1], tr=1, dim=2):
    scale_max = jnp.float32(resize_range[1])
    u = jax.random.uniform(k_scale, (N,), dtype=jnp.float32)
    scales = scale_max ** (2.0 * (u - 0.5))                  # log-uniform zoom
    trs = 2.0 * (jax.random.uniform(k_tr, (N, 2), dtype=jnp.float32) - 0.5)

    if not apply:
        # Identity branch: skip the kernel and the full HBM read+write copy.
        return x, (scales, trs), False

    # matrix row 0 -> grid x (width, translation trs[:,0]);
    # matrix row 1 -> grid y (height, translation trs[:,1]).
    a_w = _axis_interp_matrix(W, scales, trs[:, 0])          # (N, W_out, W_in)
    a_h = _axis_interp_matrix(H, scales, trs[:, 1])          # (N, H_out, H_in)
    a_w_t = jnp.swapaxes(a_w, 1, 2)                          # (N, W_in, W_out)
    out = resize_crop_pallas(x, a_h, a_w_t)
    return out, (scales, trs), True


# ---------------------------------------------------------------------------
# Pure-JAX reference: gather-based bilinear grid_sample for the same affine.
# ---------------------------------------------------------------------------
def _grid_sample_ref(x, scales, tx, ty):
    N, C, H, W = x.shape
    gx = (2.0 * jnp.arange(W, dtype=jnp.float32) + 1.0) / W - 1.0
    gy = (2.0 * jnp.arange(H, dtype=jnp.float32) + 1.0) / H - 1.0
    grid_x = jnp.broadcast_to(scales[:, None, None] * gx[None, None, :]
                              + tx[:, None, None], (N, H, W))
    grid_y = jnp.broadcast_to(scales[:, None, None] * gy[None, :, None]
                              + ty[:, None, None], (N, H, W))
    ix = ((grid_x + 1.0) * W - 1.0) * 0.5
    iy = ((grid_y + 1.0) * H - 1.0) * 0.5
    ix0f = jnp.floor(ix)
    iy0f = jnp.floor(iy)
    wx1 = ix - ix0f
    wx0 = 1.0 - wx1
    wy1 = iy - iy0f
    wy0 = 1.0 - wy1
    ix0 = ix0f.astype(jnp.int32)
    iy0 = iy0f.astype(jnp.int32)
    ix1 = ix0 + 1
    iy1 = iy0 + 1
    bidx = jnp.arange(N)[:, None, None, None]
    cidx = jnp.arange(C)[None, :, None, None]

    def tap(iyc, ixc):
        valid = (ixc >= 0) & (ixc < W) & (iyc >= 0) & (iyc < H)
        v = x[bidx, cidx,
              jnp.clip(iyc, 0, H - 1)[:, None, :, :],
              jnp.clip(ixc, 0, W - 1)[:, None, :, :]]
        return v * valid[:, None, :, :].astype(x.dtype)

    out = (tap(iy0, ix0) * (wy0 * wx0)[:, None]
           + tap(iy0, ix1) * (wy0 * wx1)[:, None]
           + tap(iy1, ix0) * (wy1 * wx0)[:, None]
           + tap(iy1, ix1) * (wy1 * wx1)[:, None])
    return out.astype(x.dtype)


if __name__ == "__main__":
    key = jax.random.PRNGKey(0)
    k_data, k_aug = jax.random.split(key)

    N, C, H, W = 2, 4, 16, 16
    x = jax.random.normal(k_data, (N, C, H, W), dtype=jnp.float32)

    # prob = 1.0 -> the resample (Pallas) path runs deterministically.
    out, (scales, trs), applied = random_resize_crop(
        x, k_aug, crop_size=(H, W), resize_range=(0.5, 2.0), prob=1.0)
    out = jax.block_until_ready(out)
    assert applied and out.shape == x.shape and out.dtype == x.dtype

    ref = _grid_sample_ref(x, scales, trs[:, 0], trs[:, 1])
    assert jnp.allclose(out, ref, atol=1e-4, rtol=1e-4), \
        "mismatch vs bilinear grid_sample reference"

    # prob = 0.0 -> identity branch short-circuits (no kernel, no copy).
    out_id, _, applied_id = random_resize_crop(x, k_aug, prob=0.0)
    assert (not applied_id) and jnp.array_equal(out_id, x)

    print("KERNEL_OK")
</pallas_src>

<mosaic_0001>
module attributes {stable_mosaic.version = 11 : i64} {
  func.func @_resize_crop_kernel(%arg0: i32, %arg1: i32, %arg2: memref<1x4x16x16xf32, #tpu.memory_space<vmem>>, %arg3: memref<1x16x16xf32, #tpu.memory_space<vmem>>, %arg4: memref<1x16x16xf32, #tpu.memory_space<vmem>>, %arg5: memref<1x4x16x16xf32, #tpu.memory_space<vmem>>) attributes {dimension_semantics = [#tpu.dimension_semantics<parallel>, #tpu.dimension_semantics<parallel>], iteration_bounds = array<i64: 2, 1>, scalar_prefetch = 0 : i64, scratch_operands = 0 : i64, tpu.core_type = #tpu.core_type<tc>, window_params = [{transform_indices = @transform_0, window_bounds = array<i64: 1, 4, 16, 16>}, {transform_indices = @transform_1, window_bounds = array<i64: 1, 16, 16>}, {transform_indices = @transform_2, window_bounds = array<i64: 1, 16, 16>}, {transform_indices = @transform_3, window_bounds = array<i64: 1, 4, 16, 16>}]} {
    %c0 = arith.constant 0 : index
    %c0_0 = arith.constant 0 : index
    %c0_1 = arith.constant 0 : index
    %0 = vector.load %arg3[%c0, %c0_0, %c0_1] : memref<1x16x16xf32, #tpu.memory_space<vmem>>, vector<1x16x16xf32>
    %1 = vector.shape_cast %0 : vector<1x16x16xf32> to vector<16x16xf32>
    %c0_2 = arith.constant 0 : index
    %c0_3 = arith.constant 0 : index
    %c0_4 = arith.constant 0 : index
    %2 = vector.load %arg4[%c0_2, %c0_3, %c0_4] : memref<1x16x16xf32, #tpu.memory_space<vmem>>, vector<1x16x16xf32>
    %3 = vector.shape_cast %2 : vector<1x16x16xf32> to vector<16x16xf32>
    %c0_5 = arith.constant 0 : index
    %c0_6 = arith.constant 0 : index
    %c0_7 = arith.constant 0 : index
    %c0_8 = arith.constant 0 : index
    %4 = vector.load %arg2[%c0_5, %c0_6, %c0_7, %c0_8] : memref<1x4x16x16xf32, #tpu.memory_space<vmem>>, vector<1x1x16x16xf32>
    %5 = vector.shape_cast %4 : vector<1x1x16x16xf32> to vector<16x16xf32>
    %cst = arith.constant dense<0.000000e+00> : vector<16x16xf32>
    %6 = tpu.matmul %1, %5, %cst {dimension_numbers = #tpu.dot_dimension_numbers<[1], [0], [0], [1], [0, 0, 1, 1], [], []>} : vector<16x16xf32>, vector<16x16xf32>, vector<16x16xf32> -> vector<16x16xf32>
    %cst_9 = arith.constant dense<0.000000e+00> : vector<16x16xf32>
    %7 = tpu.matmul %6, %3, %cst_9 {dimension_numbers = #tpu.dot_dimension_numbers<[1], [0], [0], [1], [0, 0, 1, 1], [], []>} : vector<16x16xf32>, vector<16x16xf32>, vector<16x16xf32> -> vector<16x16xf32>
    %c0_10 = arith.constant 0 : index
    %c0_11 = arith.constant 0 : index
    %c0_12 = arith.constant 0 : index
    %c0_13 = arith.constant 0 : index
    %8 = vector.load %arg5[%c0_10, %c0_11, %c0_12, %c0_13] : memref<1x4x16x16xf32, #tpu.memory_space<vmem>>, vector<1x1x16x16xf32>
    %9 = vector.shape_cast %8 : vector<1x1x16x16xf32> to vector<16x16xf32>
    %10 = vector.shape_cast %7 : vector<16x16xf32> to vector<1x1x16x16xf32>
    tpu.vector_store %arg5[%c0_10, %c0_11, %c0_12, %c0_13], %10 {strides = array<i32>} : memref<1x4x16x16xf32, #tpu.memory_space<vmem>>, vector<1x1x16x16xf32>,
    %c0_14 = arith.constant 0 : index
    %c1 = arith.constant 1 : index
    %c0_15 = arith.constant 0 : index
    %c0_16 = arith.constant 0 : index
    %11 = vector.load %arg2[%c0_14, %c1, %c0_15, %c0_16] : memref<1x4x16x16xf32, #tpu.memory_space<vmem>>, vector<1x1x16x16xf32>
    %12 = vector.shape_cast %11 : vector<1x1x16x16xf32> to vector<16x16xf32>
    %cst_17 = arith.constant dense<0.000000e+00> : vector<16x16xf32>
    %13 = tpu.matmul %1, %12, %cst_17 {dimension_numbers = #tpu.dot_dimension_numbers<[1], [0], [0], [1], [0, 0, 1, 1], [], []>} : vector<16x16xf32>, vector<16x16xf32>, vector<16x16xf32> -> vector<16x16xf32>
    %cst_18 = arith.constant dense<0.000000e+00> : vector<16x16xf32>
    %14 = tpu.matmul %13, %3, %cst_18 {dimension_numbers = #tpu.dot_dimension_numbers<[1], [0], [0], [1], [0, 0, 1, 1], [], []>} : vector<16x16xf32>, vector<16x16xf32>, vector<16x16xf32> -> vector<16x16xf32>
    %c0_19 = arith.constant 0 : index
    %c1_20 = arith.constant 1 : index
    %c0_21 = arith.constant 0 : index
    %c0_22 = arith.constant 0 : index
    %15 = vector.load %arg5[%c0_19, %c1_20, %c0_21, %c0_22] : memref<1x4x16x16xf32, #tpu.memory_space<vmem>>, vector<1x1x16x16xf32>
    %16 = vector.shape_cast %15 : vector<1x1x16x16xf32> to vector<16x16xf32>
    %17 = vector.shape_cast %14 : vector<16x16xf32> to vector<1x1x16x16xf32>
    tpu.vector_store %arg5[%c0_19, %c1_20, %c0_21, %c0_22], %17 {strides = array<i32>} : memref<1x4x16x16xf32, #tpu.memory_space<vmem>>, vector<1x1x16x16xf32>,
    %c0_23 = arith.constant 0 : index
    %c2 = arith.constant 2 : index
    %c0_24 = arith.constant 0 : index
    %c0_25 = arith.constant 0 : index
    %18 = vector.load %arg2[%c0_23, %c2, %c0_24, %c0_25] : memref<1x4x16x16xf32, #tpu.memory_space<vmem>>, vector<1x1x16x16xf32>
    %19 = vector.shape_cast %18 : vector<1x1x16x16xf32> to vector<16x16xf32>
    %cst_26 = arith.constant dense<0.000000e+00> : vector<16x16xf32>
    %20 = tpu.matmul %1, %19, %cst_26 {dimension_numbers = #tpu.dot_dimension_numbers<[1], [0], [0], [1], [0, 0, 1, 1], [], []>} : vector<16x16xf32>, vector<16x16xf32>, vector<16x16xf32> -> vector<16x16xf32>
    %cst_27 = arith.constant dense<0.000000e+00> : vector<16x16xf32>
    %21 = tpu.matmul %20, %3, %cst_27 {dimension_numbers = #tpu.dot_dimension_numbers<[1], [0], [0], [1], [0, 0, 1, 1], [], []>} : vector<16x16xf32>, vector<16x16xf32>, vector<16x16xf32> -> vector<16x16xf32>
    %c0_28 = arith.constant 0 : index
    %c2_29 = arith.constant 2 : index
    %c0_30 = arith.constant 0 : index
    %c0_31 = arith.constant 0 : index
    %22 = vector.load %arg5[%c0_28, %c2_29, %c0_30, %c0_31] : memref<1x4x16x16xf32, #tpu.memory_space<vmem>>, vector<1x1x16x16xf32>
    %23 = vector.shape_cast %22 : vector<1x1x16x16xf32> to vector<16x16xf32>
    %24 = vector.shape_cast %21 : vector<16x16xf32> to vector<1x1x16x16xf32>
    tpu.vector_store %arg5[%c0_28, %c2_29, %c0_30, %c0_31], %24 {strides = array<i32>} : memref<1x4x16x16xf32, #tpu.memory_space<vmem>>, vector<1x1x16x16xf32>,
    %c0_32 = arith.constant 0 : index
    %c3 = arith.constant 3 : index
    %c0_33 = arith.constant 0 : index
    %c0_34 = arith.constant 0 : index
    %25 = vector.load %arg2[%c0_32, %c3, %c0_33, %c0_34] : memref<1x4x16x16xf32, #tpu.memory_space<vmem>>, vector<1x1x16x16xf32>
    %26 = vector.shape_cast %25 : vector<1x1x16x16xf32> to vector<16x16xf32>
    %cst_35 = arith.constant dense<0.000000e+00> : vector<16x16xf32>
    %27 = tpu.matmul %1, %26, %cst_35 {dimension_numbers = #tpu.dot_dimension_numbers<[1], [0], [0], [1], [0, 0, 1, 1], [], []>} : vector<16x16xf32>, vector<16x16xf32>, vector<16x16xf32> -> vector<16x16xf32>
    %cst_36 = arith.constant dense<0.000000e+00> : vector<16x16xf32>
    %28 = tpu.matmul %27, %3, %cst_36 {dimension_numbers = #tpu.dot_dimension_numbers<[1], [0], [0], [1], [0, 0, 1, 1], [], []>} : vector<16x16xf32>, vector<16x16xf32>, vector<16x16xf32> -> vector<16x16xf32>
    %c0_37 = arith.constant 0 : index
    %c3_38 = arith.constant 3 : index
    %c0_39 = arith.constant 0 : index
    %c0_40 = arith.constant 0 : index
    %29 = vector.load %arg5[%c0_37, %c3_38, %c0_39, %c0_40] : memref<1x4x16x16xf32, #tpu.memory_space<vmem>>, vector<1x1x16x16xf32>
    %30 = vector.shape_cast %29 : vector<1x1x16x16xf32> to vector<16x16xf32>
    %31 = vector.shape_cast %28 : vector<16x16xf32> to vector<1x1x16x16xf32>
    tpu.vector_store %arg5[%c0_37, %c3_38, %c0_39, %c0_40], %31 {strides = array<i32>} : memref<1x4x16x16xf32, #tpu.memory_space<vmem>>, vector<1x1x16x16xf32>,
    return
  }
  func.func @transform_0(%arg0: i32, %arg1: i32) -> (i32, i32, i32, i32) {
    %c0_i32 = arith.constant 0 : i32
    %c0_i32_0 = arith.constant 0 : i32
    %c0_i32_1 = arith.constant 0 : i32
    return %arg0, %arg1, %c0_i32, %c0_i32_0 : i32, i32, i32, i32
  }
  func.func @transform_1(%arg0: i32, %arg1: i32) -> (i32, i32, i32) {
    %c0_i32 = arith.constant 0 : i32
    %c0_i32_0 = arith.constant 0 : i32
    %c0_i32_1 = arith.constant 0 : i32
    return %arg0, %c0_i32, %c0_i32_0 : i32, i32, i32
  }
  func.func @transform_2(%arg0: i32, %arg1: i32) -> (i32, i32, i32) {
    %c0_i32 = arith.constant 0 : i32
    %c0_i32_0 = arith.constant 0 : i32
    %c0_i32_1 = arith.constant 0 : i32
    return %arg0, %c0_i32, %c0_i32_0 : i32, i32, i32
  }
  func.func @transform_3(%arg0: i32, %arg1: i32) -> (i32, i32, i32, i32) {
    %c0_i32 = arith.constant 0 : i32
    %c0_i32_0 = arith.constant 0 : i32
    %c0_i32_1 = arith.constant 0 : i32
    return %arg0, %arg1, %c0_i32, %c0_i32_0 : i32, i32, i32, i32
  }
}

</mosaic_0001>

<llo_original>
// kernel: tpu_custom_call.1
$region0: #{tpu_custom_call.1}
  #allocation0 [shape = 'u32[]', space=smem, size = 0x4, offset = 0x4, fixed_abs, tag = 'smem constant byte address 0x4 - core index']
  #allocation1 [shape = 'u32[144,128]{1,0:T(1,128)}', space=vmem, size = 0x12000, scoped, tag = 'internal scratch']
  %s0 = inlined_call_operand.hbm [shape: f32[2,4,16,16], index: 0, kind: input, shape index: {}]
  %s1 = inlined_call_operand.hbm [shape: f32[2,16,16], index: 1, kind: input, shape index: {}]
  %s2 = inlined_call_operand.hbm [shape: f32[2,16,16], index: 2, kind: input, shape index: {}]
  %s3 = inlined_call_operand.hbm [shape: f32[2,4,16,16], index: 3, kind: output, shape index: {}]
  %s4 = sld [smem:[#allocation0]]
  $region57: #{tpu_custom_call.1} parent=0
    _
  %s6 = ssub.s32 1, %s4
  %s7 = scalar_select 0, %s6, %s4
  $region1: #{tpu_custom_call.1} parent=0
    #allocation2 [shape = 'u8[65536]{0}', space=vmem, size = 0x10000, scoped, tag = 'input window, operand 0']
    #allocation3 [shape = 's32[2]{0}', space=sflag, size = 0x8, scoped, tag = 'scoped memory for tpu_custom_call.1']
    #allocation4 [shape = 's32[2]{0}', space=sflag, size = 0x8, scoped, tag = 'scoped memory for tpu_custom_call.1']
    #allocation5 [shape = 'u8[16384]{0}', space=vmem, size = 0x4000, scoped, tag = 'input window, operand 1']
    #allocation6 [shape = 's32[2]{0}', space=sflag, size = 0x8, scoped, tag = 'scoped memory for tpu_custom_call.1']
    #allocation7 [shape = 'u8[16384]{0}', space=vmem, size = 0x4000, scoped, tag = 'input window, operand 2']
    #allocation8 [shape = 'u8[65536]{0}', space=vmem, size = 0x10000, scoped, tag = 'output window, operand 0']
    %8 = vsyncpa [#allocation3], 0
    %s9 = scalar_lea.sflag [#allocation3], 1
    %10 = vsyncpa %s9, 0
    %11 = vsyncpa [#allocation6], 0
    %s12 = scalar_lea.sflag [#allocation6], 1
    %13 = vsyncpa %s12, 0
    %14 = vsyncpa [#allocation4], 0
    %s15 = scalar_lea.sflag [#allocation4], 1
    %16 = vsyncpa %s15, 0
    loop: start=0, step=1, limit=4
    $region2: #{tpu_custom_call.1} parent=1 // loop_pre_header
      _
    $region3: #{tpu_custom_call.1} parent=1 // loop_header
      %s18 = sphi 0, %s22
      %p19 = scmp.ge.s32.totalorder %s18, 4
      %s25 = sphi 0, %s37
      %s26 = sphi 0, %s33
      %s27 = sphi 0, %s25
      %s28 = sphi 0, %s26
      %s29 = sphi 0, %s27
      %s30 = sphi 0, %s28
      %s42 = sphi 0, %s44
      %s45 = sphi 0, %s42
      %s46 = sphi 0, %s45
      %s62 = sphi 0, %s46
      %s68 = sphi 0, %s70
      %s71 = sphi 0, %s68
      %s72 = sphi 0, %s71
      %s88 = sphi 0, %s72
      %s94 = sphi 0, %s96
      %s97 = sphi 0, %s94
      %s98 = sphi 0, %s97
      %s114 = sphi 0, %s98
      %s122 = sphi 0, %s124
      %s125 = sphi 0, %s122
      %s126 = sphi 0, %s125
      %s142 = sphi 0, %s126
    $region4: #{tpu_custom_call.1} parent=1 // loop_header_branch
      %21 = sbr.rel (%p19) target = $region8
    $region5: #{tpu_custom_call.1} parent=1 // loop_body
      %s23 = ssub.s32 %s18, 1
      %s24 = ssub.s32 %s18, 2
      %s31 = sadd.s32 1, %s26
      %p32 = scmp.ge.s32.totalorder %s31, 1
      %s33 = scalar_select %p32, 0, %s31
      %s34 = sadd.s32 1, %s25
      %s35 = scalar_select %p32, %s34, %s25
      %p36 = scmp.ge.s32.totalorder %s35, 2
      %s37 = scalar_select %p36, 0, %s35
      %s38 = ssub.s32 %s25, %s37
      %s39 = ssub.s32 %s26, %s33
      %s40 = sor.u32 %s38, %s39
      %p41 = scmp.eq.s32.totalorder %s40, 0
      %s43 = sadd.s32 %s42, 1
      %s44 = scalar_select %p41, %s42, %s43
      %p47 = pneg %p41
      %p48 = scmp.eq.s32.totalorder %s18, 1
      %p49 = por %p47, %p48
      %p50 = scmp.ne.s32.totalorder %s42, %s45
      %p51 = scmp.eq.s32.totalorder %s18, 0
      %p52 = por %p50, %p51
      %p53 = scmp.ne.s32.totalorder %s42, %s45
      %p54 = scmp.eq.s32.totalorder %s23, 1
      %p55 = por %p53, %p54
      %p56 = scmp.ne.s32.totalorder %s45, %s46
      %p57 = scmp.eq.s32.totalorder %s23, 0
      %p58 = por %p56, %p57
      %p59 = scmp.ne.s32.totalorder %s45, %s46
      %p60 = scmp.eq.s32.totalorder %s24, 1
      %p61 = por %p59, %p60
      %p63 = scmp.ne.s32.totalorder %s46, %s62
      %p64 = scmp.eq.s32.totalorder %s24, 0
      %p65 = por %p63, %p64
      %s66 = ssub.s32 %s25, %s37
      %p67 = scmp.eq.s32.totalorder %s66, 0
      %s69 = sadd.s32 %s68, 1
      %s70 = scalar_select %p67, %s68, %s69
      %p73 = pneg %p67
      %p74 = scmp.eq.s32.totalorder %s18, 1
      %p75 = por %p73, %p74
      %p76 = scmp.ne.s32.totalorder %s68, %s71
      %p77 = scmp.eq.s32.totalorder %s18, 0
      %p78 = por %p76, %p77
      %p79 = scmp.ne.s32.totalorder %s68, %s71
      %p80 = scmp.eq.s32.totalorder %s23, 1
      %p81 = por %p79, %p80
      %p82 = scmp.ne.s32.totalorder %s71, %s72
      %p83 = scmp.eq.s32.totalorder %s23, 0
      %p84 = por %p82, %p83
      %p85 = scmp.ne.s32.totalorder %s71, %s72
      %p86 = scmp.eq.s32.totalorder %s24, 1
      %p87 = por %p85, %p86
      %p89 = scmp.ne.s32.totalorder %s72, %s88
      %p90 = scmp.eq.s32.totalorder %s24, 0
      %p91 = por %p89, %p90
      %s92 = ssub.s32 %s25, %s37
      %p93 = scmp.eq.s32.totalorder %s92, 0
      %s95 = sadd.s32 %s94, 1
      %s96 = scalar_select %p93, %s94, %s95
      %p99 = pneg %p93
      %p100 = scmp.eq.s32.totalorder %s18, 1
      %p101 = por %p99, %p100
      %p102 = scmp.ne.s32.totalorder %s94, %s97
      %p103 = scmp.eq.s32.totalorder %s18, 0
      %p104 = por %p102, %p103
      %p105 = scmp.ne.s32.totalorder %s94, %s97
      %p106 = scmp.eq.s32.totalorder %s23, 1
      %p107 = por %p105, %p106
      %p108 = scmp.ne.s32.totalorder %s97, %s98
      %p109 = scmp.eq.s32.totalorder %s23, 0
      %p110 = por %p108, %p109
      %p111 = scmp.ne.s32.totalorder %s97, %s98
      %p112 = scmp.eq.s32.totalorder %s24, 1
      %p113 = por %p111, %p112
      %p115 = scmp.ne.s32.totalorder %s98, %s114
      %p116 = scmp.eq.s32.totalorder %s24, 0
      %p117 = por %p115, %p116
      %s118 = ssub.s32 %s25, %s37
      %s119 = ssub.s32 %s26, %s33
      %s120 = sor.u32 %s118, %s119
      %p121 = scmp.eq.s32.totalorder %s120, 0
      %s123 = sadd.s32 %s122, 1
      %s124 = scalar_select %p121, %s122, %s123
      %p127 = pneg %p121
      %p128 = scmp.eq.s32.totalorder %s18, 1
      %p129 = por %p127, %p128
      %p130 = scmp.ne.s32.totalorder %s122, %s125
      %p131 = scmp.eq.s32.totalorder %s18, 0
      %p132 = por %p130, %p131
      %p133 = scmp.ne.s32.totalorder %s122, %s125
      %p134 = scmp.eq.s32.totalorder %s23, 1
      %p135 = por %p133, %p134
      %p136 = scmp.ne.s32.totalorder %s125, %s126
      %p137 = scmp.eq.s32.totalorder %s23, 0
      %p138 = por %p136, %p137
      %p139 = scmp.ne.s32.totalorder %s125, %s126
      %p140 = scmp.eq.s32.totalorder %s24, 1
      %p141 = por %p139, %p140
      %p143 = scmp.ne.s32.totalorder %s126, %s142
      %p144 = scmp.eq.s32.totalorder %s24, 0
      %p145 = por %p143, %p144
      %p146 = scmp.le.s32.totalorder 1, %s18
      %p147 = scmp.lt.s32.totalorder %s18, 3
      %p148 = pnand %p146, %p147
      %p149 = pneg %p148
      // Predicated region
      $region9: #{tpu_custom_call.1} parent=5 // pred_check
        _
      $region10: #{tpu_custom_call.1} parent=5 // pred_check_branch
        %151 = sbr.rel (%p148) target = $region12
      $region11: #{tpu_custom_call.1} parent=5 // pred_region
        %s152 = ssub.s32 %s18, 1
      $region12: #{tpu_custom_call.1} parent=5 // pred_fallthru
        _
      %p153 = scmp.lt.s32.totalorder %s18, 2
      // Predicated region
      $region13: #{tpu_custom_call.1} parent=5 // pred_check
        %p154 = pneg %p153
      $region14: #{tpu_custom_call.1} parent=5 // pred_check_branch
        %156 = sbr.rel (%p154) target = $region16
      $region15: #{tpu_custom_call.1} parent=5 // pred_region
        // Predicated region
        $region17: #{tpu_custom_call.1} parent=15 // pred_check
          %p157 = pneg %p52
        $region18: #{tpu_custom_call.1} parent=15 // pred_check_branch
          %159 = sbr.rel (%p157) target = $region20
        $region19: #{tpu_custom_call.1} parent=15 // pred_region
          %s160 = sand.u32 %s42, 1
          %s161 = scalar_lea.sflag [#allocation3], %s160
          %s162 = sand.u32 %s42, 1
          %s163 = smul.addr %s162, 64
          %s164 = scalar_lea.vmem [#allocation2], %s163
          %s165 = smul.u32 4, %s26
          %s167 = ssub.s32 1024, 1024
          %168 = vsyncadd %s161, %s167
          %s169 = smul.addr %s165, 2
          %s170 = smul.addr %s25, 8
          %s171 = sadd.s32 %s169, %s170
          %s172 = smul.addr %s171, 128
          %s173 = scalar_lea.hbm %s0, %s172
          %s174 = sshll.u32 %s164, 4
          %s175 = int_to_ptr.vmem [resolvable:$true] %s174
          %180 = dma.hbm_to_vmem [thread:$0]  %s173, 1024, %s175, %s161, 128, 128, 8
        $region20: #{tpu_custom_call.1} parent=15 // pred_fallthru
          _
        // Predicated region
        $region21: #{tpu_custom_call.1} parent=15 // pred_check
          %p181 = pneg %p78
        $region22: #{tpu_custom_call.1} parent=15 // pred_check_branch
          %183 = sbr.rel (%p181) target = $region24
        $region23: #{tpu_custom_call.1} parent=15 // pred_region
          %s184 = sand.u32 %s18, 1
          %s185 = scalar_lea.sflag [#allocation6], %s184
          %s186 = sand.u32 %s68, 1
          %s187 = smul.addr %s186, 16
          %s188 = scalar_lea.vmem [#allocation5], %s187
          %s190 = ssub.s32 256, 256
          %191 = vsyncadd %s185, %s190
          %s192 = smul.addr %s25, 2
          %s193 = smul.addr %s192, 128
          %s194 = scalar_lea.hbm %s1, %s193
          %s195 = sshll.u32 %s188, 4
          %s196 = int_to_ptr.vmem [resolvable:$true] %s195
          %201 = dma.hbm_to_vmem [thread:$0]  %s194, 256, %s196, %s185, 128, 128, 8
        $region24: #{tpu_custom_call.1} parent=15 // pred_fallthru
          _
        // Predicated region
        $region25: #{tpu_custom_call.1} parent=15 // pred_check
          %p202 = pneg %p104
        $region26: #{tpu_custom_call.1} parent=15 // pred_check_branch
          %204 = sbr.rel (%p202) target = $region28
        $region27: #{tpu_custom_call.1} parent=15 // pred_region
          %s205 = sand.u32 %s18, 1
          %s206 = scalar_lea.sflag [#allocation6], %s205
          %s207 = sand.u32 %s94, 1
          %s208 = smul.addr %s207, 16
          %s209 = scalar_lea.vmem [#allocation7], %s208
          %s211 = ssub.s32 256, 256
          %212 = vsyncadd %s206, %s211
          %s213 = smul.addr %s25, 2
          %s214 = smul.addr %s213, 128
          %s215 = scalar_lea.hbm %s2, %s214
          %s216 = sshll.u32 %s209, 4
          %s217 = int_to_ptr.vmem [resolvable:$true] %s216
          %222 = dma.hbm_to_vmem [thread:$0]  %s215, 256, %s217, %s206, 128, 128, 8
        $region28: #{tpu_custom_call.1} parent=15 // pred_fallthru
          _
      $region16: #{tpu_custom_call.1} parent=5 // pred_fallthru
        _
      %p223 = scmp.le.s32.totalorder 1, %s18
      %p224 = scmp.lt.s32.totalorder %s18, 3
      %p225 = pnand %p223, %p224
      %p226 = pneg %p225
      // Predicated region
      $region29: #{tpu_custom_call.1} parent=5 // pred_check
        _
      $region30: #{tpu_custom_call.1} parent=5 // pred_check_branch
        %228 = sbr.rel (%p225) target = $region32
      $region31: #{tpu_custom_call.1} parent=5 // pred_region
        %s229 = ssub.s32 %s18, 1
        %s230 = sand.u32 %s45, 1
        %s231 = scalar_lea.sflag [#allocation3], %s230
        %s232 = sand.u32 %s45, 1
        %s233 = smul.addr %s232, 64
        %s234 = scalar_lea.vmem [#allocation2], %s233
        // Predicated region
        $region33: #{tpu_custom_call.1} parent=31 // pred_check
          %p235 = pneg %p58
        $region34: #{tpu_custom_call.1} parent=31 // pred_check_branch
          %237 = sbr.rel (%p235) target = $region36
        $region35: #{tpu_custom_call.1} parent=31 // pred_region
          %238 = dma.done %s231, 1024
        $region36: #{tpu_custom_call.1} parent=31 // pred_fallthru
          _
        %s239 = sand.u32 %s23, 1
        %s240 = scalar_lea.sflag [#allocation6], %s239
        %s241 = sand.u32 %s71, 1
        %s242 = smul.addr %s241, 16
        %s243 = scalar_lea.vmem [#allocation5], %s242
        // Predicated region
        $region37: #{tpu_custom_call.1} parent=31 // pred_check
          %p244 = pneg %p84
        $region38: #{tpu_custom_call.1} parent=31 // pred_check_branch
          %246 = sbr.rel (%p244) target = $region40
        $region39: #{tpu_custom_call.1} parent=31 // pred_region
          %247 = dma.done %s240, 256
        $region40: #{tpu_custom_call.1} parent=31 // pred_fallthru
          _
        %s248 = sand.u32 %s23, 1
        %s249 = scalar_lea.sflag [#allocation6], %s248
        %s250 = sand.u32 %s97, 1
        %s251 = smul.addr %s250, 16
        %s252 = scalar_lea.vmem [#allocation7], %s251
        // Predicated region
        $region41: #{tpu_custom_call.1} parent=31 // pred_check
          %p253 = pneg %p110
        $region42: #{tpu_custom_call.1} parent=31 // pred_check_branch
          %255 = sbr.rel (%p253) target = $region44
        $region43: #{tpu_custom_call.1} parent=31 // pred_region
          %256 = dma.done %s249, 256
        $region44: #{tpu_custom_call.1} parent=31 // pred_fallthru
          _
        %s257 = sand.u32 %s45, 1
        %s258 = scalar_lea.sflag [#allocation3], %s257
        %s259 = sand.u32 %s45, 1
        %s260 = smul.addr %s259, 64
        %s261 = scalar_lea.vmem [#allocation2], %s260
        %p262 = pneg %p58
        %p263 = pneg %p55
        %s264 = sand.u32 %s23, 1
        %s265 = scalar_lea.sflag [#allocation6], %s264
        %s266 = sand.u32 %s71, 1
        %s267 = smul.addr %s266, 16
        %s268 = scalar_lea.vmem [#allocation5], %s267
        %p269 = pneg %p84
        %p270 = pneg %p81
        %s271 = sand.u32 %s23, 1
        %s272 = scalar_lea.sflag [#allocation6], %s271
        %s273 = sand.u32 %s97, 1
        %s274 = smul.addr %s273, 16
        %s275 = scalar_lea.vmem [#allocation7], %s274
        %p276 = pneg %p110
        %p277 = pneg %p107
        %p278 = pneg %p138
        %p279 = pneg %p135
        %s280 = sand.u32 %s125, 1
        %s281 = scalar_lea.sflag [#allocation4], %s280
        %s282 = sand.u32 %s125, 1
        %s283 = smul.addr %s282, 64
        %s284 = scalar_lea.vmem [#allocation8], %s283
        %s285 = smul.u32 4, %s28
        %s286 = smul.u32 4, %s28
        %v287 = vld [vmem:[%s243] sm:$0xff]
        %v288 = vld [vmem:[%s243 + $0x8] sm:$0xff]
        %v289 = vld [vmem:[%s252] sm:$0xff]
        %v290 = vld [vmem:[%s252 + $0x8] sm:$0xff]
        %v291 = vld [vmem:[%s234] sm:$0xff]
        %v292 = vld [vmem:[%s234 + $0x8] sm:$0xff]
        %vm293 = vcmask 130048
        %v295 = vsel %vm293, %v287, 0
        %v298 = vsel %vm293, %v288, 0
        %300 = vmatprep.subr.mxu0 0.0
        %301 = vmatpush1.msra.mxu0 %v291
        %302 = vmatprep.subr.mxu0 0.0
        %303 = vmatpush1.msra.mxu0 %v292
        %304 = vmatprep.subr.mxu0 0.0
        %305 = vmatpush1.msra.mxu0 0.0
        %306 = vmatprep.subr.mxu0 0.0
        %307 = vmatpush1.msra.mxu0 0.0
        %308 = vmatprep.subr.mxu0 0.0
        %309 = vmatpush1.msra.mxu0 0.0
        %310 = vmatprep.subr.mxu0 0.0
        %311 = vmatpush1.msra.mxu0 0.0
        %312 = vmatprep.subr.mxu0 0.0
        %313 = vmatpush1.msra.mxu0 0.0
        %314 = vmatprep.subr.mxu0 0.0
        %315 = vmatpush1.msra.mxu0 0.0
        %316 = vmatprep.subr.mxu0 0.0
        %317 = vmatpush1.msra.mxu0 0.0
        %318 = vmatprep.subr.mxu0 0.0
        %319 = vmatpush1.msra.mxu0 0.0
        %320 = vmatprep.subr.mxu0 0.0
        %321 = vmatpush1.msra.mxu0 0.0
        %322 = vmatprep.subr.mxu0 0.0
        %323 = vmatpush1.msra.mxu0 0.0
        %324 = vmatprep.subr.mxu0 0.0
        %325 = vmatpush1.msra.mxu0 0.0
        %326 = vmatprep.subr.mxu0 0.0
        %327 = vmatpush1.msra.mxu0 0.0
        %328 = vmatprep.subr.mxu0 0.0
        %329 = vmatpush1.msra.mxu0 0.0
        %330 = vmatprep.subr.mxu0 0.0
        %331 = vmatpush1.msra.mxu0 0.0
        %332 = vmatprep.subr.mxu0 0.0
        %333 = vmatpush1.msra.mxu0 0.0
        %334 = vmatprep.subr.mxu0 0.0
        %335 = vmatpush1.msra.mxu0 0.0
        %336 = vmatprep.subr.mxu0 0.0
        %337 = vmatpush1.msra.mxu0 0.0
        %338 = vmatprep.subr.mxu0 0.0
        %339 = vmatpush1.msra.mxu0 0.0
        %340 = vmatprep.subr.mxu0 0.0
        %341 = vmatpush1.msra.mxu0 0.0
        %342 = vmatprep.subr.mxu0 0.0
        %343 = vmatpush1.msra.mxu0 0.0
        %344 = vmatprep.subr.mxu0 0.0
        %345 = vmatpush1.msra.mxu0 0.0
        %346 = vmatprep.subr.mxu0 0.0
        %347 = vmatpush1.msra.mxu0 0.0
        %348 = vmatprep.subr.mxu0 0.0
        %349 = vmatpush1.msra.mxu0 0.0
        %350 = vmatprep.subr.mxu0 0.0
        %351 = vmatpush1.msra.mxu0 0.0
        %352 = vmatprep.subr.mxu0 0.0
        %353 = vmatpush1.msra.mxu0 0.0
        %354 = vmatprep.subr.mxu0 0.0
        %355 = vmatpush1.msra.mxu0 0.0
        %356 = vmatprep.subr.mxu0 0.0
        %357 = vmatpush1.msra.mxu0 0.0
        %358 = vmatprep.subr.mxu0 0.0
        %359 = vmatpush1.msra.mxu0 0.0
        %360 = vmatprep.subr.mxu0 0.0
        %361 = vmatpush1.msra.mxu0 0.0
        %362 = vmatprep.subr.mxu0 0.0
        %363 = vmatpush1.msra.mxu0 0.0
        %364 = vmatprep.mubr.f32.mxu0 0.0
        %365 = vmatmul.mubr.f32.gmra.mrb[0].mxu0 %v295
        %v366 = vpop.f32.mrb[0].mxu0
        %v367 = vadd.f32 0.0, %v366
        %v368 = vpop.f32.mrb[0].mxu0
        %369 = vmatprep.mubr.f32.mxu0 0.0
        %370 = vmatmul.mubr.f32.gmra.mrb[0].mxu0 %v298
        %v371 = vpop.f32.mrb[0].mxu0
        %v372 = vadd.f32 0.0, %v371
        %v373 = vpop.f32.mrb[0].mxu0
        %374 = vdwg.mxu0
        %v376 = vsel %vm293, %v367, 0
        %v379 = vsel %vm293, %v372, 0
        %381 = vmatprep.subr.mxu0 0.0
        %382 = vmatpush1.msra.mxu0 %v289
        %383 = vmatprep.subr.mxu0 0.0
        %384 = vmatpush1.msra.mxu0 %v290
        %385 = vmatprep.subr.mxu0 0.0
        %386 = vmatpush1.msra.mxu0 0.0
        %387 = vmatprep.subr.mxu0 0.0
        %388 = vmatpush1.msra.mxu0 0.0
        %389 = vmatprep.subr.mxu0 0.0
        %390 = vmatpush1.msra.mxu0 0.0
        %391 = vmatprep.subr.mxu0 0.0
        %392 = vmatpush1.msra.mxu0 0.0
        %393 = vmatprep.subr.mxu0 0.0
        %394 = vmatpush1.msra.mxu0 0.0
        %395 = vmatprep.subr.mxu0 0.0
        %396 = vmatpush1.msra.mxu0 0.0
        %397 = vmatprep.subr.mxu0 0.0
        %398 = vmatpush1.msra.mxu0 0.0
        %399 = vmatprep.subr.mxu0 0.0
        %400 = vmatpush1.msra.mxu0 0.0
        %401 = vmatprep.subr.mxu0 0.0
        %402 = vmatpush1.msra.mxu0 0.0
        %403 = vmatprep.subr.mxu0 0.0
        %404 = vmatpush1.msra.mxu0 0.0
        %405 = vmatprep.subr.mxu0 0.0
        %406 = vmatpush1.msra.mxu0 0.0
        %407 = vmatprep.subr.mxu0 0.0
        %408 = vmatpush1.msra.mxu0 0.0
        %409 = vmatprep.subr.mxu0 0.0
        %410 = vmatpush1.msra.mxu0 0.0
        %411 = vmatprep.subr.mxu0 0.0
        %412 = vmatpush1.msra.mxu0 0.0
        %413 = vmatprep.subr.mxu0 0.0
        %414 = vmatpush1.msra.mxu0 0.0
        %415 = vmatprep.subr.mxu0 0.0
        %416 = vmatpush1.msra.mxu0 0.0
        %417 = vmatprep.subr.mxu0 0.0
        %418 = vmatpush1.msra.mxu0 0.0
        %419 = vmatprep.subr.mxu0 0.0
        %420 = vmatpush1.msra.mxu0 0.0
        %421 = vmatprep.subr.mxu0 0.0
        %422 = vmatpush1.msra.mxu0 0.0
        %423 = vmatprep.subr.mxu0 0.0
        %424 = vmatpush1.msra.mxu0 0.0
        %425 = vmatprep.subr.mxu0 0.0
        %426 = vmatpush1.msra.mxu0 0.0
        %427 = vmatprep.subr.mxu0 0.0
        %428 = vmatpush1.msra.mxu0 0.0
        %429 = vmatprep.subr.mxu0 0.0
        %430 = vmatpush1.msra.mxu0 0.0
        %431 = vmatprep.subr.mxu0 0.0
        %432 = vmatpush1.msra.mxu0 0.0
        %433 = vmatprep.subr.mxu0 0.0
        %434 = vmatpush1.msra.mxu0 0.0
        %435 = vmatprep.subr.mxu0 0.0
        %436 = vmatpush1.msra.mxu0 0.0
        %437 = vmatprep.subr.mxu0 0.0
        %438 = vmatpush1.msra.mxu0 0.0
        %439 = vmatprep.subr.mxu0 0.0
        %440 = vmatpush1.msra.mxu0 0.0
        %441 = vmatprep.subr.mxu0 0.0
        %442 = vmatpush1.msra.mxu0 0.0
        %443 = vmatprep.subr.mxu0 0.0
        %444 = vmatpush1.msra.mxu0 0.0
        %445 = vmatprep.mubr.f32.mxu0 0.0
        %446 = vmatmul.mubr.f32.gmra.mrb[0].mxu0 %v376
        %v447 = vpop.f32.mrb[0].mxu0
        %v448 = vadd.f32 0.0, %v447
        %v449 = vpop.f32.mrb[0].mxu0
        %450 = vmatprep.mubr.f32.mxu0 0.0
        %451 = vmatmul.mubr.f32.gmra.mrb[0].mxu0 %v379
        %v452 = vpop.f32.mrb[0].mxu0
        %v453 = vadd.f32 0.0, %v452
        %v454 = vpop.f32.mrb[0].mxu0
        %455 = vdwg.mxu0
        %456 = vst.msk [vmem:[%s284] sm:$0xff] %vm293, %v448
        %457 = vst.msk [vmem:[%s284 + $0x8] sm:$0xff] %vm293, %v453
        %s458 = scalar_lea.vmem %s234, 16 [#allocation2]
        %v459 = vld [vmem:[%s458] sm:$0xff]
        %v460 = vld [vmem:[%s458 + $0x8] sm:$0xff]
        %461 = vmatprep.subr.mxu0 0.0
        %462 = vmatpush1.msra.mxu0 %v459
        %463 = vmatprep.subr.mxu0 0.0
        %464 = vmatpush1.msra.mxu0 %v460
        %465 = vmatprep.subr.mxu0 0.0
        %466 = vmatpush1.msra.mxu0 0.0
        %467 = vmatprep.subr.mxu0 0.0
        %468 = vmatpush1.msra.mxu0 0.0
        %469 = vmatprep.subr.mxu0 0.0
        %470 = vmatpush1.msra.mxu0 0.0
        %471 = vmatprep.subr.mxu0 0.0
        %472 = vmatpush1.msra.mxu0 0.0
        %473 = vmatprep.subr.mxu0 0.0
        %474 = vmatpush1.msra.mxu0 0.0
        %475 = vmatprep.subr.mxu0 0.0
        %476 = vmatpush1.msra.mxu0 0.0
        %477 = vmatprep.subr.mxu0 0.0
        %478 = vmatpush1.msra.mxu0 0.0
        %479 = vmatprep.subr.mxu0 0.0
        %480 = vmatpush1.msra.mxu0 0.0
        %481 = vmatprep.subr.mxu0 0.0
        %482 = vmatpush1.msra.mxu0 0.0
        %483 = vmatprep.subr.mxu0 0.0
        %484 = vmatpush1.msra.mxu0 0.0
        %485 = vmatprep.subr.mxu0 0.0
        %486 = vmatpush1.msra.mxu0 0.0
        %487 = vmatprep.subr.mxu0 0.0
        %488 = vmatpush1.msra.mxu0 0.0
        %489 = vmatprep.subr.mxu0 0.0
        %490 = vmatpush1.msra.mxu0 0.0
        %491 = vmatprep.subr.mxu0 0.0
        %492 = vmatpush1.msra.mxu0 0.0
        %493 = vmatprep.subr.mxu0 0.0
        %494 = vmatpush1.msra.mxu0 0.0
        %495 = vmatprep.subr.mxu0 0.0
        %496 = vmatpush1.msra.mxu0 0.0
        %497 = vmatprep.subr.mxu0 0.0
        %498 = vmatpush1.msra.mxu0 0.0
        %499 = vmatprep.subr.mxu0 0.0
        %500 = vmatpush1.msra.mxu0 0.0
        %501 = vmatprep.subr.mxu0 0.0
        %502 = vmatpush1.msra.mxu0 0.0
        %503 = vmatprep.subr.mxu0 0.0
        %504 = vmatpush1.msra.mxu0 0.0
        %505 = vmatprep.subr.mxu0 0.0
        %506 = vmatpush1.msra.mxu0 0.0
        %507 = vmatprep.subr.mxu0 0.0
        %508 = vmatpush1.msra.mxu0 0.0
        %509 = vmatprep.subr.mxu0 0.0
        %510 = vmatpush1.msra.mxu0 0.0
        %511 = vmatprep.subr.mxu0 0.0
        %512 = vmatpush1.msra.mxu0 0.0
        %513 = vmatprep.subr.mxu0 0.0
        %514 = vmatpush1.msra.mxu0 0.0
        %515 = vmatprep.subr.mxu0 0.0
        %516 = vmatpush1.msra.mxu0 0.0
        %517 = vmatprep.subr.mxu0 0.0
        %518 = vmatpush1.msra.mxu0 0.0
        %519 = vmatprep.subr.mxu0 0.0
        %520 = vmatpush1.msra.mxu0 0.0
        %521 = vmatprep.subr.mxu0 0.0
        %522 = vmatpush1.msra.mxu0 0.0
        %523 = vmatprep.subr.mxu0 0.0
        %524 = vmatpush1.msra.mxu0 0.0
        %525 = vmatprep.mubr.f32.mxu0 0.0
        %526 = vmatmul.mubr.f32.gmra.mrb[0].mxu0 %v295
        %v527 = vpop.f32.mrb[0].mxu0
        %v528 = vadd.f32 0.0, %v527
        %v529 = vpop.f32.mrb[0].mxu0
        %530 = vmatprep.mubr.f32.mxu0 0.0
        %531 = vmatmul.mubr.f32.gmra.mrb[0].mxu0 %v298
        %v532 = vpop.f32.mrb[0].mxu0
        %v533 = vadd.f32 0.0, %v532
        %v534 = vpop.f32.mrb[0].mxu0
        %535 = vdwg.mxu0
        %v537 = vsel %vm293, %v528, 0
        %v540 = vsel %vm293, %v533, 0
        %542 = vmatprep.subr.mxu0 0.0
        %543 = vmatpush1.msra.mxu0 %v289
        %544 = vmatprep.subr.mxu0 0.0
        %545 = vmatpush1.msra.mxu0 %v290
        %546 = vmatprep.subr.mxu0 0.0
        %547 = vmatpush1.msra.mxu0 0.0
        %548 = vmatprep.subr.mxu0 0.0
        %549 = vmatpush1.msra.mxu0 0.0
        %550 = vmatprep.subr.mxu0 0.0
        %551 = vmatpush1.msra.mxu0 0.0
        %552 = vmatprep.subr.mxu0 0.0
        %553 = vmatpush1.msra.mxu0 0.0
        %554 = vmatprep.subr.mxu0 0.0
        %555 = vmatpush1.msra.mxu0 0.0
        %556 = vmatprep.subr.mxu0 0.0
        %557 = vmatpush1.msra.mxu0 0.0
        %558 = vmatprep.subr.mxu0 0.0
        %559 = vmatpush1.msra.mxu0 0.0
        %560 = vmatprep.subr.mxu0 0.0
        %561 = vmatpush1.msra.mxu0 0.0
        %562 = vmatprep.subr.mxu0 0.0
        %563 = vmatpush1.msra.mxu0 0.0
        %564 = vmatprep.subr.mxu0 0.0
        %565 = vmatpush1.msra.mxu0 0.0
        %566 = vmatprep.subr.mxu0 0.0
        %567 = vmatpush1.msra.mxu0 0.0
        %568 = vmatprep.subr.mxu0 0.0
        %569 = vmatpush1.msra.mxu0 0.0
        %570 = vmatprep.subr.mxu0 0.0
        %571 = vmatpush1.msra.mxu0 0.0
        %572 = vmatprep.subr.mxu0 0.0
        %573 = vmatpush1.msra.mxu0 0.0
        %574 = vmatprep.subr.mxu0 0.0
        %575 = vmatpush1.msra.mxu0 0.0
        %576 = vmatprep.subr.mxu0 0.0
        %577 = vmatpush1.msra.mxu0 0.0
        %578 = vmatprep.subr.mxu0 0.0
        %579 = vmatpush1.msra.mxu0 0.0
        %580 = vmatprep.subr.mxu0 0.0
        %581 = vmatpush1.msra.mxu0 0.0
        %582 = vmatprep.subr.mxu0 0.0
        %583 = vmatpush1.msra.mxu0 0.0
        %584 = vmatprep.subr.mxu0 0.0
        %585 = vmatpush1.msra.mxu0 0.0
        %586 = vmatprep.subr.mxu0 0.0
        %587 = vmatpush1.msra.mxu0 0.0
        %588 = vmatprep.subr.mxu0 0.0
        %589 = vmatpush1.msra.mxu0 0.0
        %590 = vmatprep.subr.mxu0 0.0
        %591 = vmatpush1.msra.mxu0 0.0
        %592 = vmatprep.subr.mxu0 0.0
        %593 = vmatpush1.msra.mxu0 0.0
        %594 = vmatprep.subr.mxu0 0.0
        %595 = vmatpush1.msra.mxu0 0.0
        %596 = vmatprep.subr.mxu0 0.0
        %597 = vmatpush1.msra.mxu0 0.0
        %598 = vmatprep.subr.mxu0 0.0
        %599 = vmatpush1.msra.mxu0 0.0
        %600 = vmatprep.subr.mxu0 0.0
        %601 = vmatpush1.msra.mxu0 0.0
        %602 = vmatprep.subr.mxu0 0.0
        %603 = vmatpush1.msra.mxu0 0.0
        %604 = vmatprep.subr.mxu0 0.0
        %605 = vmatpush1.msra.mxu0 0.0
        %606 = vmatprep.mubr.f32.mxu0 0.0
        %607 = vmatmul.mubr.f32.gmra.mrb[0].mxu0 %v537
        %v608 = vpop.f32.mrb[0].mxu0
        %v609 = vadd.f32 0.0, %v608
        %v610 = vpop.f32.mrb[0].mxu0
        %611 = vmatprep.mubr.f32.mxu0 0.0
        %612 = vmatmul.mubr.f32.gmra.mrb[0].mxu0 %v540
        %v613 = vpop.f32.mrb[0].mxu0
        %v614 = vadd.f32 0.0, %v613
        %v615 = vpop.f32.mrb[0].mxu0
        %616 = vdwg.mxu0
        %s617 = scalar_lea.vmem %s284, 16 [#allocation8]
        %618 = vst.msk [vmem:[%s617] sm:$0xff] %vm293, %v609
        %619 = vst.msk [vmem:[%s617 + $0x8] sm:$0xff] %vm293, %v614
        %s620 = scalar_lea.vmem %s234, 32 [#allocation2]
        %v621 = vld [vmem:[%s620] sm:$0xff]
        %v622 = vld [vmem:[%s620 + $0x8] sm:$0xff]
        %623 = vmatprep.subr.mxu0 0.0
        %624 = vmatpush1.msra.mxu0 %v621
        %625 = vmatprep.subr.mxu0 0.0
        %626 = vmatpush1.msra.mxu0 %v622
        %627 = vmatprep.subr.mxu0 0.0
        %628 = vmatpush1.msra.mxu0 0.0
        %629 = vmatprep.subr.mxu0 0.0
        %630 = vmatpush1.msra.mxu0 0.0
        %631 = vmatprep.subr.mxu0 0.0
        %632 = vmatpush1.msra.mxu0 0.0
        %633 = vmatprep.subr.mxu0 0.0
        %634 = vmatpush1.msra.mxu0 0.0
        %635 = vmatprep.subr.mxu0 0.0
        %636 = vmatpush1.msra.mxu0 0.0
        %637 = vmatprep.subr.mxu0 0.0
        %638 = vmatpush1.msra.mxu0 0.0
        %639 = vmatprep.subr.mxu0 0.0
        %640 = vmatpush1.msra.mxu0 0.0
        %641 = vmatprep.subr.mxu0 0.0
        %642 = vmatpush1.msra.mxu0 0.0
        %643 = vmatprep.subr.mxu0 0.0
        %644 = vmatpush1.msra.mxu0 0.0
        %645 = vmatprep.subr.mxu0 0.0
        %646 = vmatpush1.msra.mxu0 0.0
        %647 = vmatprep.subr.mxu0 0.0
        %648 = vmatpush1.msra.mxu0 0.0
        %649 = vmatprep.subr.mxu0 0.0
        %650 = vmatpush1.msra.mxu0 0.0
        %651 = vmatprep.subr.mxu0 0.0
        %652 = vmatpush1.msra.mxu0 0.0
        %653 = vmatprep.subr.mxu0 0.0
        %654 = vmatpush1.msra.mxu0 0.0
        %655 = vmatprep.subr.mxu0 0.0
        %656 = vmatpush1.msra.mxu0 0.0
        %657 = vmatprep.subr.mxu0 0.0
        %658 = vmatpush1.msra.mxu0 0.0
        %659 = vmatprep.subr.mxu0 0.0
        %660 = vmatpush1.msra.mxu0 0.0
        %661 = vmatprep.subr.mxu0 0.0
        %662 = vmatpush1.msra.mxu0 0.0
        %663 = vmatprep.subr.mxu0 0.0
        %664 = vmatpush1.msra.mxu0 0.0
        %665 = vmatprep.subr.mxu0 0.0
        %666 = vmatpush1.msra.mxu0 0.0
        %667 = vmatprep.subr.mxu0 0.0
        %668 = vmatpush1.msra.mxu0 0.0
        %669 = vmatprep.subr.mxu0 0.0
        %670 = vmatpush1.msra.mxu0 0.0
        %671 = vmatprep.subr.mxu0 0.0
        %672 = vmatpush1.msra.mxu0 0.0
        %673 = vmatprep.subr.mxu0 0.0
        %674 = vmatpush1.msra.mxu0 0.0
        %675 = vmatprep.subr.mxu0 0.0
        %676 = vmatpush1.msra.mxu0 0.0
        %677 = vmatprep.subr.mxu0 0.0
        %678 = vmatpush1.msra.mxu0 0.0
        %679 = vmatprep.subr.mxu0 0.0
        %680 = vmatpush1.msra.mxu0 0.0
        %681 = vmatprep.subr.mxu0 0.0
        %682 = vmatpush1.msra.mxu0 0.0
        %683 = vmatprep.subr.mxu0 0.0
        %684 = vmatpush1.msra.mxu0 0.0
        %685 = vmatprep.subr.mxu0 0.0
        %686 = vmatpush1.msra.mxu0 0.0
        %687 = vmatprep.mubr.f32.mxu0 0.0
        %688 = vmatmul.mubr.f32.gmra.mrb[0].mxu0 %v295
        %v689 = vpop.f32.mrb[0].mxu0
        %v690 = vadd.f32 0.0, %v689
        %v691 = vpop.f32.mrb[0].mxu0
        %692 = vmatprep.mubr.f32.mxu0 0.0
        %693 = vmatmul.mubr.f32.gmra.mrb[0].mxu0 %v298
        %v694 = vpop.f32.mrb[0].mxu0
        %v695 = vadd.f32 0.0, %v694
        %v696 = vpop.f32.mrb[0].mxu0
        %697 = vdwg.mxu0
        %v699 = vsel %vm293, %v690, 0
        %v702 = vsel %vm293, %v695, 0
        %704 = vmatprep.subr.mxu0 0.0
        %705 = vmatpush1.msra.mxu0 %v289
        %706 = vmatprep.subr.mxu0 0.0
        %707 = vmatpush1.msra.mxu0 %v290
        %708 = vmatprep.subr.mxu0 0.0
        %709 = vmatpush1.msra.mxu0 0.0
        %710 = vmatprep.subr.mxu0 0.0
        %711 = vmatpush1.msra.mxu0 0.0
        %712 = vmatprep.subr.mxu0 0.0
        %713 = vmatpush1.msra.mxu0 0.0
        %714 = vmatprep.subr.mxu0 0.0
        %715 = vmatpush1.msra.mxu0 0.0
        %716 = vmatprep.subr.mxu0 0.0
        %717 = vmatpush1.msra.mxu0 0.0
        %718 = vmatprep.subr.mxu0 0.0
        %719 = vmatpush1.msra.mxu0 0.0
        %720 = vmatprep.subr.mxu0 0.0
        %721 = vmatpush1.msra.mxu0 0.0
        %722 = vmatprep.subr.mxu0 0.0
        %723 = vmatpush1.msra.mxu0 0.0
        %724 = vmatprep.subr.mxu0 0.0
        %725 = vmatpush1.msra.mxu0 0.0
        %726 = vmatprep.subr.mxu0 0.0
        %727 = vmatpush1.msra.mxu0 0.0
        %728 = vmatprep.subr.mxu0 0.0
        %729 = vmatpush1.msra.mxu0 0.0
        %730 = vmatprep.subr.mxu0 0.0
        %731 = vmatpush1.msra.mxu0 0.0
        %732 = vmatprep.subr.mxu0 0.0
        %733 = vmatpush1.msra.mxu0 0.0
        %734 = vmatprep.subr.mxu0 0.0
        %735 = vmatpush1.msra.mxu0 0.0
        %736 = vmatprep.subr.mxu0 0.0
        %737 = vmatpush1.msra.mxu0 0.0
        %738 = vmatprep.subr.mxu0 0.0
        %739 = vmatpush1.msra.mxu0 0.0
        %740 = vmatprep.subr.mxu0 0.0
        %741 = vmatpush1.msra.mxu0 0.0
        %742 = vmatprep.subr.mxu0 0.0
        %743 = vmatpush1.msra.mxu0 0.0
        %744 = vmatprep.subr.mxu0 0.0
        %745 = vmatpush1.msra.mxu0 0.0
        %746 = vmatprep.subr.mxu0 0.0
        %747 = vmatpush1.msra.mxu0 0.0
        %748 = vmatprep.subr.mxu0 0.0
        %749 = vmatpush1.msra.mxu0 0.0
        %750 = vmatprep.subr.mxu0 0.0
        %751 = vmatpush1.msra.mxu0 0.0
        %752 = vmatprep.subr.mxu0 0.0
        %753 = vmatpush1.msra.mxu0 0.0
        %754 = vmatprep.subr.mxu0 0.0
        %755 = vmatpush1.msra.mxu0 0.0
        %756 = vmatprep.subr.mxu0 0.0
        %757 = vmatpush1.msra.mxu0 0.0
        %758 = vmatprep.subr.mxu0 0.0
        %759 = vmatpush1.msra.mxu0 0.0
        %760 = vmatprep.subr.mxu0 0.0
        %761 = vmatpush1.msra.mxu0 0.0
        %762 = vmatprep.subr.mxu0 0.0
        %763 = vmatpush1.msra.mxu0 0.0
        %764 = vmatprep.subr.mxu0 0.0
        %765 = vmatpush1.msra.mxu0 0.0
        %766 = vmatprep.subr.mxu0 0.0
        %767 = vmatpush1.msra.mxu0 0.0
        %768 = vmatprep.mubr.f32.mxu0 0.0
        %769 = vmatmul.mubr.f32.gmra.mrb[0].mxu0 %v699
        %v770 = vpop.f32.mrb[0].mxu0
        %v771 = vadd.f32 0.0, %v770
        %v772 = vpop.f32.mrb[0].mxu0
        %773 = vmatprep.mubr.f32.mxu0 0.0
        %774 = vmatmul.mubr.f32.gmra.mrb[0].mxu0 %v702
        %v775 = vpop.f32.mrb[0].mxu0
        %v776 = vadd.f32 0.0, %v775
        %v777 = vpop.f32.mrb[0].mxu0
        %778 = vdwg.mxu0
        %s779 = scalar_lea.vmem %s284, 32 [#allocation8]
        %780 = vst.msk [vmem:[%s779] sm:$0xff] %vm293, %v771
        %781 = vst.msk [vmem:[%s779 + $0x8] sm:$0xff] %vm293, %v776
        %s782 = scalar_lea.vmem %s234, 48 [#allocation2]
        %v783 = vld [vmem:[%s782] sm:$0xff]
        %v784 = vld [vmem:[%s782 + $0x8] sm:$0xff]
        %785 = vmatprep.subr.mxu0 0.0
        %786 = vmatpush1.msra.mxu0 %v783
        %787 = vmatprep.subr.mxu0 0.0
        %788 = vmatpush1.msra.mxu0 %v784
        %789 = vmatprep.subr.mxu0 0.0
        %790 = vmatpush1.msra.mxu0 0.0
        %791 = vmatprep.subr.mxu0 0.0
        %792 = vmatpush1.msra.mxu0 0.0
        %793 = vmatprep.subr.mxu0 0.0
        %794 = vmatpush1.msra.mxu0 0.0
        %795 = vmatprep.subr.mxu0 0.0
        %796 = vmatpush1.msra.mxu0 0.0
        %797 = vmatprep.subr.mxu0 0.0
        %798 = vmatpush1.msra.mxu0 0.0
        %799 = vmatprep.subr.mxu0 0.0
        %800 = vmatpush1.msra.mxu0 0.0
        %801 = vmatprep.subr.mxu0 0.0
        %802 = vmatpush1.msra.mxu0 0.0
        %803 = vmatprep.subr.mxu0 0.0
        %804 = vmatpush1.msra.mxu0 0.0
        %805 = vmatprep.subr.mxu0 0.0
        %806 = vmatpush1.msra.mxu0 0.0
        %807 = vmatprep.subr.mxu0 0.0
        %808 = vmatpush1.msra.mxu0 0.0
        %809 = vmatprep.subr.mxu0 0.0
        %810 = vmatpush1.msra.mxu0 0.0
        %811 = vmatprep.subr.mxu0 0.0
        %812 = vmatpush1.msra.mxu0 0.0
        %813 = vmatprep.subr.mxu0 0.0
        %814 = vmatpush1.msra.mxu0 0.0
        %815 = vmatprep.subr.mxu0 0.0
        %816 = vmatpush1.msra.mxu0 0.0
        %817 = vmatprep.subr.mxu0 0.0
        %818 = vmatpush1.msra.mxu0 0.0
        %819 = vmatprep.subr.mxu0 0.0
        %820 = vmatpush1.msra.mxu0 0.0
        %821 = vmatprep.subr.mxu0 0.0
        %822 = vmatpush1.msra.mxu0 0.0
        %823 = vmatprep.subr.mxu0 0.0
        %824 = vmatpush1.msra.mxu0 0.0
        %825 = vmatprep.subr.mxu0 0.0
        %826 = vmatpush1.msra.mxu0 0.0
        %827 = vmatprep.subr.mxu0 0.0
        %828 = vmatpush1.msra.mxu0 0.0
        %829 = vmatprep.subr.mxu0 0.0
        %830 = vmatpush1.msra.mxu0 0.0
        %831 = vmatprep.subr.mxu0 0.0
        %832 = vmatpush1.msra.mxu0 0.0
        %833 = vmatprep.subr.mxu0 0.0
        %834 = vmatpush1.msra.mxu0 0.0
        %835 = vmatprep.subr.mxu0 0.0
        %836 = vmatpush1.msra.mxu0 0.0
        %837 = vmatprep.subr.mxu0 0.0
        %838 = vmatpush1.msra.mxu0 0.0
        %839 = vmatprep.subr.mxu0 0.0
        %840 = vmatpush1.msra.mxu0 0.0
        %841 = vmatprep.subr.mxu0 0.0
        %842 = vmatpush1.msra.mxu0 0.0
        %843 = vmatprep.subr.mxu0 0.0
        %844 = vmatpush1.msra.mxu0 0.0
        %845 = vmatprep.subr.mxu0 0.0
        %846 = vmatpush1.msra.mxu0 0.0
        %847 = vmatprep.subr.mxu0 0.0
        %848 = vmatpush1.msra.mxu0 0.0
        %849 = vmatprep.mubr.f32.mxu0 0.0
        %850 = vmatmul.mubr.f32.gmra.mrb[0].mxu0 %v295
        %v851 = vpop.f32.mrb[0].mxu0
        %v852 = vadd.f32 0.0, %v851
        %v853 = vpop.f32.mrb[0].mxu0
        %854 = vmatprep.mubr.f32.mxu0 0.0
        %855 = vmatmul.mubr.f32.gmra.mrb[0].mxu0 %v298
        %v856 = vpop.f32.mrb[0].mxu0
        %v857 = vadd.f32 0.0, %v856
        %v858 = vpop.f32.mrb[0].mxu0
        %859 = vdwg.mxu0
        %v861 = vsel %vm293, %v852, 0
        %v864 = vsel %vm293, %v857, 0
        %866 = vmatprep.subr.mxu0 0.0
        %867 = vmatpush1.msra.mxu0 %v289
        %868 = vmatprep.subr.mxu0 0.0
        %869 = vmatpush1.msra.mxu0 %v290
        %870 = vmatprep.subr.mxu0 0.0
        %871 = vmatpush1.msra.mxu0 0.0
        %872 = vmatprep.subr.mxu0 0.0
        %873 = vmatpush1.msra.mxu0 0.0
        %874 = vmatprep.subr.mxu0 0.0
        %875 = vmatpush1.msra.mxu0 0.0
        %876 = vmatprep.subr.mxu0 0.0
        %877 = vmatpush1.msra.mxu0 0.0
        %878 = vmatprep.subr.mxu0 0.0
        %879 = vmatpush1.msra.mxu0 0.0
        %880 = vmatprep.subr.mxu0 0.0
        %881 = vmatpush1.msra.mxu0 0.0
        %882 = vmatprep.subr.mxu0 0.0
        %883 = vmatpush1.msra.mxu0 0.0
        %884 = vmatprep.subr.mxu0 0.0
        %885 = vmatpush1.msra.mxu0 0.0
        %886 = vmatprep.subr.mxu0 0.0
        %887 = vmatpush1.msra.mxu0 0.0
        %888 = vmatprep.subr.mxu0 0.0
        %889 = vmatpush1.msra.mxu0 0.0
        %890 = vmatprep.subr.mxu0 0.0
        %891 = vmatpush1.msra.mxu0 0.0
        %892 = vmatprep.subr.mxu0 0.0
        %893 = vmatpush1.msra.mxu0 0.0
        %894 = vmatprep.subr.mxu0 0.0
        %895 = vmatpush1.msra.mxu0 0.0
        %896 = vmatprep.subr.mxu0 0.0
        %897 = vmatpush1.msra.mxu0 0.0
        %898 = vmatprep.subr.mxu0 0.0
        %899 = vmatpush1.msra.mxu0 0.0
        %900 = vmatprep.subr.mxu0 0.0
        %901 = vmatpush1.msra.mxu0 0.0
        %902 = vmatprep.subr.mxu0 0.0
        %903 = vmatpush1.msra.mxu0 0.0
        %904 = vmatprep.subr.mxu0 0.0
        %905 = vmatpush1.msra.mxu0 0.0
        %906 = vmatprep.subr.mxu0 0.0
        %907 = vmatpush1.msra.mxu0 0.0
        %908 = vmatprep.subr.mxu0 0.0
        %909 = vmatpush1.msra.mxu0 0.0
        %910 = vmatprep.subr.mxu0 0.0
        %911 = vmatpush1.msra.mxu0 0.0
        %912 = vmatprep.subr.mxu0 0.0
        %913 = vmatpush1.msra.mxu0 0.0
        %914 = vmatprep.subr.mxu0 0.0
        %915 = vmatpush1.msra.mxu0 0.0
        %916 = vmatprep.subr.mxu0 0.0
        %917 = vmatpush1.msra.mxu0 0.0
        %918 = vmatprep.subr.mxu0 0.0
        %919 = vmatpush1.msra.mxu0 0.0
        %920 = vmatprep.subr.mxu0 0.0
        %921 = vmatpush1.msra.mxu0 0.0
        %922 = vmatprep.subr.mxu0 0.0
        %923 = vmatpush1.msra.mxu0 0.0
        %924 = vmatprep.subr.mxu0 0.0
        %925 = vmatpush1.msra.mxu0 0.0
        %926 = vmatprep.subr.mxu0 0.0
        %927 = vmatpush1.msra.mxu0 0.0
        %928 = vmatprep.subr.mxu0 0.0
        %929 = vmatpush1.msra.mxu0 0.0
        %930 = vmatprep.mubr.f32.mxu0 0.0
        %931 = vmatmul.mubr.f32.gmra.mrb[0].mxu0 %v861
        %v932 = vpop.f32.mrb[0].mxu0
        %v933 = vadd.f32 0.0, %v932
        %v934 = vpop.f32.mrb[0].mxu0
        %935 = vmatprep.mubr.f32.mxu0 0.0
        %936 = vmatmul.mubr.f32.gmra.mrb[0].mxu0 %v864
        %v937 = vpop.f32.mrb[0].mxu0
        %v938 = vadd.f32 0.0, %v937
        %v939 = vpop.f32.mrb[0].mxu0
        %940 = vdwg.mxu0
        %s941 = scalar_lea.vmem %s284, 48 [#allocation8]
        %942 = vst.msk [vmem:[%s941] sm:$0xff] %vm293, %v933
        %943 = vst.msk [vmem:[%s941 + $0x8] sm:$0xff] %vm293, %v938
        %s944 = sand.u32 %s125, 1
        %s945 = scalar_lea.sflag [#allocation4], %s944
        %s946 = sand.u32 %s125, 1
        %s947 = smul.addr %s946, 64
        %s948 = scalar_lea.vmem [#allocation8], %s947
        // Predicated region
        $region45: #{tpu_custom_call.1} parent=31 // pred_check
          %p949 = pneg %p135
        $region46: #{tpu_custom_call.1} parent=31 // pred_check_branch
          %951 = sbr.rel (%p949) target = $region48
        $region47: #{tpu_custom_call.1} parent=31 // pred_region
          %s952 = smul.u32 4, %s28
          %s954 = ssub.s32 1024, 1024
          %955 = vsyncadd %s945, %s954
          %s956 = smul.addr %s952, 2
          %s957 = smul.addr %s27, 8
          %s958 = sadd.s32 %s956, %s957
          %s959 = smul.addr %s958, 128
          %s960 = scalar_lea.hbm %s3, %s959
          %s961 = sshll.u32 %s948, 4
          %s962 = int_to_ptr.vmem [resolvable:$true] %s961
          %967 = dma.vmem_to_hbm [thread:$0]  %s962, 1024, %s960, %s945, 128, 128, 8
        $region48: #{tpu_custom_call.1} parent=31 // pred_fallthru
          _
      $region32: #{tpu_custom_call.1} parent=5 // pred_fallthru
        _
      %p968 = scmp.le.s32.totalorder 2, %s18
      // Predicated region
      $region49: #{tpu_custom_call.1} parent=5 // pred_check
        %p969 = pneg %p968
      $region50: #{tpu_custom_call.1} parent=5 // pred_check_branch
        %971 = sbr.rel (%p969) target = $region52
      $region51: #{tpu_custom_call.1} parent=5 // pred_region
        %s972 = ssub.s32 %s18, 2
        // Predicated region
        $region53: #{tpu_custom_call.1} parent=51 // pred_check
          %p973 = pneg %p141
        $region54: #{tpu_custom_call.1} parent=51 // pred_check_branch
          %975 = sbr.rel (%p973) target = $region56
        $region55: #{tpu_custom_call.1} parent=51 // pred_region
          %s976 = sand.u32 %s126, 1
          %s977 = scalar_lea.sflag [#allocation4], %s976
          %s978 = sand.u32 %s126, 1
          %s979 = smul.addr %s978, 64
          %s980 = scalar_lea.vmem [#allocation8], %s979
          %981 = dma.done %s977, 1024
        $region56: #{tpu_custom_call.1} parent=51 // pred_fallthru
          _
      $region52: #{tpu_custom_call.1} parent=5 // pred_fallthru
        _
    $region6: #{tpu_custom_call.1} parent=1 // loop_footer
      %s22 = sadd.s32 1, %s18
    $region7: #{tpu_custom_call.1} parent=1 // loop_footer_branch
      %17 = sbr.rel target = $region3
    $region8: #{tpu_custom_call.1} parent=1 // loop_exit
      _
    %982 = vsyncpa [#allocation3], 1
    %s983 = scalar_lea.sflag [#allocation3], 1
    %984 = vsyncpa %s983, 1
    %985 = vsyncpa [#allocation6], 1
    %s986 = scalar_lea.sflag [#allocation6], 1
    %987 = vsyncpa %s986, 1
    %988 = vsyncpa [#allocation4], 1
    %s989 = scalar_lea.sflag [#allocation4], 1
    %990 = vsyncpa %s989, 1

</llo_original>
